<compile_context>
chip_gen: v6e
topology: v6e:2x2x1
jax: 0.10.0
libtpu: 0.0.40
codegen_flags: <defaults>
</compile_context>

<pallas_src>
import functools

import jax
import jax.numpy as jnp
from jax.experimental import pallas as pl
from jax.experimental.pallas import tpu as pltpu


# ----------------------------------------------------------------------------
# Kernel 1: scaled cost volume  cost = feat1^T @ feat2 / Cf
# ----------------------------------------------------------------------------
def _cost_volume_kernel(a_ref, b_ref, o_ref, *, inv_c):
    # a_ref: [1, tm, Cf] (feat1 pre-transposed in the wrapper -> plain matmul)
    # b_ref: [1, Cf, tn]
    # o_ref: [1, tm, tn] bf16
    acc = jnp.dot(a_ref[0], b_ref[0], preferred_element_type=jnp.float32)
    o_ref[0] = (acc * inv_c).astype(o_ref.dtype)


def cost_volume_bmm(feat1, feat2):
    # feat1: [B, Cf, N1], feat2: [B, Cf, N2] -> [B, N1, N2] (bf16)
    B, Cf, N1 = feat1.shape
    N2 = feat2.shape[2]
    tm = N1 if N1 <= 1024 else 1024        # big tiles amortize per-step overhead
    tn = N2 if N2 <= 1024 else 1024
    # One O(Cf*N1) wrapper transpose (negligible vs the O(N1*N2) output) keeps the
    # in-kernel contraction a plain [tm,Cf]@[Cf,tn] — no per-tile transpose risk.
    f1t = jnp.transpose(feat1, (0, 2, 1)).astype(jnp.bfloat16)
    f2 = feat2.astype(jnp.bfloat16)
    kernel = functools.partial(_cost_volume_kernel, inv_c=1.0 / Cf)
    return pl.pallas_call(
        kernel,
        out_shape=jax.ShapeDtypeStruct((B, N1, N2), jnp.bfloat16),
        grid=(B, pl.cdiv(N1, tm), pl.cdiv(N2, tn)),
        in_specs=[
            pl.BlockSpec((1, tm, Cf), lambda b, i, j: (b, i, 0)),
            pl.BlockSpec((1, Cf, tn), lambda b, i, j: (b, 0, j)),
        ],
        out_specs=pl.BlockSpec((1, tm, tn), lambda b, i, j: (b, i, j)),
        compiler_params=pltpu.CompilerParams(
            dimension_semantics=("parallel", "parallel", "parallel")),
    )(f1t, f2)


# ----------------------------------------------------------------------------
# Kernel 2: fused kNN — pairwise squared distances on the VPU + in-kernel
#           running k-best over input tiles (no dense distance matrix in HBM)
# ----------------------------------------------------------------------------
def _knn_kernel(q_ref, p_ref, idx_ref, bd_ref, bi_ref, *, k, n_input, tile_i):
    # q_ref  : [1, tq, 3]   query points (coords minor)
    # p_ref  : [1, 3, ti]   input points, channel-first, points lane-dense
    # idx_ref: [1, tq, k]   int32 output
    # bd/bi  : [tq, k]      VMEM scratch — running best distances / indices (f32)
    j = pl.program_id(2)

    @pl.when(j == 0)
    def _():
        bd_ref[...] = jnp.full_like(bd_ref, jnp.inf)
        bi_ref[...] = jnp.zeros_like(bi_ref)

    q = q_ref[0]
    p = p_ref[0]
    # exact-difference formulation: 3 broadcast subs + FMAs on the VPU
    d0 = q[:, 0:1] - p[0:1, :]
    d1 = q[:, 1:2] - p[1:2, :]
    d2 = q[:, 2:3] - p[2:3, :]
    dist = d0 * d0 + d1 * d1 + d2 * d2                          # [tq, ti] f32

    col_i = j * tile_i + jax.lax.broadcasted_iota(jnp.int32, dist.shape, 1)
    dist = jnp.where(col_i < n_input, dist, jnp.inf)            # mask grid padding
    col = col_i.astype(jnp.float32)                             # indices carried as f32

    cand_d = jnp.concatenate([bd_ref[...], dist], axis=-1)      # [tq, k + ti]
    cand_i = jnp.concatenate([bi_ref[...], col], axis=-1)

    kept_d, kept_i = [], []
    for _ in range(k):                                          # unrolled selection
        m = jnp.min(cand_d, axis=-1, keepdims=True)
        sel = cand_d == m
        mi = jnp.min(jnp.where(sel, cand_i, jnp.inf), axis=-1, keepdims=True)
        kept_d.append(m)
        kept_i.append(mi)
        # remove exactly the selected entry (ties resolved by smallest index)
        cand_d = jnp.where(sel & (cand_i == mi), jnp.inf, cand_d)
    bd_ref[...] = jnp.concatenate(kept_d, axis=-1)
    bi_ref[...] = jnp.concatenate(kept_i, axis=-1)

    @pl.when(j == pl.num_programs(2) - 1)
    def _():
        idx_ref[0] = bi_ref[...].astype(jnp.int32)


def k_nearest_neighbor(input_xyz, query_xyz, k):
    # indices into input_xyz for each point of query_xyz: [B, Nq, k] int32
    B, _, Nq = query_xyz.shape
    Ni = input_xyz.shape[2]
    assert Ni >= k, "need at least k input points"
    tq = Nq if Nq <= 128 else 128
    ti = Ni if Ni <= 512 else 512
    q_t = jnp.transpose(query_xyz, (0, 2, 1)).astype(jnp.float32)   # O(3*Nq) relayout
    kernel = functools.partial(_knn_kernel, k=k, n_input=Ni, tile_i=ti)
    return pl.pallas_call(
        kernel,
        out_shape=jax.ShapeDtypeStruct((B, Nq, k), jnp.int32),
        grid=(B, pl.cdiv(Nq, tq), pl.cdiv(Ni, ti)),
        in_specs=[
            pl.BlockSpec((1, tq, 3), lambda b, i, j: (b, i, 0)),
            pl.BlockSpec((1, 3, ti), lambda b, i, j: (b, 0, j)),
        ],
        out_specs=pl.BlockSpec((1, tq, k), lambda b, i, j: (b, i, 0)),
        scratch_shapes=[pltpu.VMEM((tq, k), jnp.float32),
                        pltpu.VMEM((tq, k), jnp.float32)],
        compiler_params=pltpu.CompilerParams(
            dimension_semantics=("parallel", "parallel", "arbitrary")),
    )(q_t, input_xyz.astype(jnp.float32))


# ----------------------------------------------------------------------------
# Kernel 3: fused cost MLP (two 1x1 convs + ReLU) + sum over K + merge conv
#           + LeakyReLU(0.1) — channel-first / points-on-lanes throughout.
#
# The 1x1 convs act independently per (neighbour k, point n); their weights are
# Kronecker-expanded with I_K in the wrapper (w1k = kron(W1, I_K), ...), so each
# layer is ONE dense lane-aligned MXU matmul on [*, tn1] operands with zero
# in-kernel relayout (the [4,K,tn1] -> [4K,tn1] reshape is layout-preserving for
# K % 8 == 0).  The extra structured-zero MXU flops are cheap next to the
# kernel's HBM traffic; the K-sum and merge then need no lane shuffles, and the
# output is produced directly as [out_channels, tn1] (plain unmasked stores).
# ----------------------------------------------------------------------------
def _mlp_merge_kernel(*refs, n_levels, knn_k, c4):
    x_refs = refs[:n_levels]                                    # each [1,4,K,tn1] bf16
    w1_ref, b1_ref, w2_ref, b2_ref, wm_ref, bm_ref, o_ref = refs[n_levels:]
    tn1 = o_ref.shape[2]

    level_sums = []
    for lvl in range(n_levels):
        x = x_refs[lvl][0].reshape(4 * knn_k, tn1)              # rows = (channel, k)
        h = jnp.dot(w1_ref[...], x, preferred_element_type=jnp.float32)
        h = jnp.maximum(h + b1_ref[...], 0.0)                   # ReLU
        h = jnp.dot(w2_ref[...], h.astype(jnp.bfloat16),
                    preferred_element_type=jnp.float32)
        h = jnp.maximum(h + b2_ref[...], 0.0)                   # [c4*K, tn1]
        # sum over the K neighbours (rows are channel-major, k within)
        level_sums.append(jnp.sum(h.reshape(c4, knn_k, tn1), axis=1))   # [c4, tn1]

    s_all = jnp.concatenate(level_sums, axis=0)                 # [L*c4, tn1]
    y = jnp.dot(wm_ref[...], s_all.astype(jnp.bfloat16),
                preferred_element_type=jnp.float32) + bm_ref[...]
    y = jnp.where(y >= 0.0, y, 0.1 * y)                         # LeakyReLU(0.1)
    o_ref[0] = y.astype(o_ref.dtype)                            # lane-dense store


# ----------------------------------------------------------------------------
# Glue: gathers + feature construction (data-dependent indexing stays in JAX)
# ----------------------------------------------------------------------------
def _build_level_features(xyz1, xyz2, cost_volume, knn_k):
    # -> [B, 4, K, N1] bf16: channel-first (dx, dy, dz, corr), points lane-dense
    idx = k_nearest_neighbor(xyz2, xyz1, knn_k)                       # [B, N1, K]
    # TODO(synk): these data-dependent gathers stay in XLA glue; a scalar-prefetch
    # Pallas gather fused into the MLP kernel would remove this HBM round trip.
    knn_xyz2 = jax.vmap(lambda pts, i: pts[:, i])(xyz2, idx)          # [B, 3, N1, K]
    knn_xyz2_norm = knn_xyz2 - xyz1[:, :, :, None]
    knn_corr = jnp.take_along_axis(cost_volume, idx, axis=2)          # [B, N1, K]
    feat = jnp.concatenate(
        [knn_xyz2_norm, knn_corr[:, None].astype(jnp.float32)], axis=1)   # [B,4,N1,K]
    return jnp.transpose(feat, (0, 1, 3, 2)).astype(jnp.bfloat16)     # [B, 4, K, N1]


def build_cost_volume_pyramid(feat1, feat2, xyzs2, k=3):
    pyramid = [cost_volume_bmm(feat1, feat2)]                         # [B,N1,N2_0] bf16
    for i in range(1, len(xyzs2)):
        idx = k_nearest_neighbor(xyzs2[i - 1], xyzs2[i], k)           # [B, N2_i, k]
        knn_corr = jax.vmap(lambda cv, ib: cv[:, ib])(pyramid[i - 1], idx)  # [B,N1,N2_i,k]
        pyramid.append(jnp.mean(knn_corr, axis=-1))                   # [B, N1, N2_i]
    return pyramid


def correlation3d_forward(xyz1, xyzs2, cost_volume_pyramid, params, knn_k, out_channels):
    B, _, N1 = xyz1.shape
    n_levels = len(xyzs2)
    c4 = out_channels // 4
    tn1 = N1 if N1 <= 256 else 256        # lane tile of the output / features

    level_feats = [
        _build_level_features(xyz1, xyzs2[l], cost_volume_pyramid[l], knn_k)
        for l in range(n_levels)
    ]

    # Kronecker-expanded 1x1-conv weights (see _mlp_merge_kernel comment).
    eye_k = jnp.eye(knn_k, dtype=jnp.float32)
    w1k = jnp.kron(params["w1"], eye_k).astype(jnp.bfloat16)           # [c4*K, 4*K]
    w2k = jnp.kron(params["w2"], eye_k).astype(jnp.bfloat16)           # [c4*K, c4*K]
    b1k = jnp.repeat(params["b1"], knn_k)[:, None]                     # [c4*K, 1] f32
    b2k = jnp.repeat(params["b2"], knn_k)[:, None]
    wm = params["wm"].astype(jnp.bfloat16)                             # [out, L*c4]
    bm = params["bm"][:, None]                                         # [out, 1] f32

    kernel = functools.partial(_mlp_merge_kernel, n_levels=n_levels,
                               knn_k=knn_k, c4=c4)
    x_specs = [pl.BlockSpec((1, 4, knn_k, tn1), lambda b, i: (b, 0, 0, i))
               for _ in range(n_levels)]
    w_specs = [
        pl.BlockSpec((c4 * knn_k, 4 * knn_k), lambda b, i: (0, 0)),
        pl.BlockSpec((c4 * knn_k, 1), lambda b, i: (0, 0)),
        pl.BlockSpec((c4 * knn_k, c4 * knn_k), lambda b, i: (0, 0)),
        pl.BlockSpec((c4 * knn_k, 1), lambda b, i: (0, 0)),
        pl.BlockSpec((out_channels, n_levels * c4), lambda b, i: (0, 0)),
        pl.BlockSpec((out_channels, 1), lambda b, i: (0, 0)),
    ]
    # NOTE(v7x megacore): B * cdiv(N1, tn1) should be >= 2 / even so the parallel
    # axes shard across both TensorCores.
    return pl.pallas_call(
        kernel,
        out_shape=jax.ShapeDtypeStruct((B, out_channels, N1), jnp.float32),
        grid=(B, pl.cdiv(N1, tn1)),
        in_specs=x_specs + w_specs,
        out_specs=pl.BlockSpec((1, out_channels, tn1), lambda b, i: (b, 0, i)),
        compiler_params=pltpu.CompilerParams(
            dimension_semantics=("parallel", "parallel"),
            vmem_limit_bytes=32 * 1024 * 1024),
    )(*level_feats, w1k, b1k, w2k, b2k, wm, bm)


def init_params(key, out_channels, n_levels=4):
    # Weights in PyTorch 1x1-conv orientation [out_ch, in_ch] (kernel dims squeezed).
    c4 = out_channels // 4
    ks = jax.random.split(key, 6)
    return {
        "w1": 0.1 * jax.random.normal(ks[0], (c4, 4), jnp.float32),
        "b1": 0.1 * jax.random.normal(ks[1], (c4,), jnp.float32),
        "w2": 0.1 * jax.random.normal(ks[2], (c4, c4), jnp.float32),
        "b2": 0.1 * jax.random.normal(ks[3], (c4,), jnp.float32),
        "wm": 0.1 * jax.random.normal(ks[4], (out_channels, n_levels * c4), jnp.float32),
        "bm": 0.1 * jax.random.normal(ks[5], (out_channels,), jnp.float32),
    }


def _reference_forward(xyz1, xyzs2, pyramid, params, knn_k):
    # Pure-JAX f32 reference of the PyTorch module (reuses the Pallas kNN indices;
    # the kNN itself is validated separately against dense distances).
    level_costs = []
    for l, xyz2 in enumerate(xyzs2):
        cv = pyramid[l].astype(jnp.float32)
        idx = k_nearest_neighbor(xyz2, xyz1, knn_k)                   # [B, N1, K]
        knn_xyz2 = jax.vmap(lambda p, i: p[:, i])(xyz2, idx)          # [B, 3, N1, K]
        g = knn_xyz2 - xyz1[:, :, :, None]
        corr = jnp.take_along_axis(cv, idx, axis=2)[:, None]          # [B, 1, N1, K]
        x = jnp.concatenate([g, corr], axis=1)                        # [B, 4, N1, K]
        h = jnp.maximum(jnp.einsum('oi,bink->bonk', params["w1"], x)
                        + params["b1"][None, :, None, None], 0.0)
        h = jnp.maximum(jnp.einsum('oc,bcnk->bonk', params["w2"], h)
                        + params["b2"][None, :, None, None], 0.0)
        level_costs.append(jnp.sum(h, axis=-1))                       # [B, c4, N1]
    costs = jnp.concatenate(level_costs, axis=1)                      # [B, L*c4, N1]
    y = (jnp.einsum('oc,bcn->bon', params["wm"], costs)
         + params["bm"][None, :, None])
    return jnp.where(y >= 0.0, y, 0.1 * y)


def _rel_err(a, b):
    a = a.astype(jnp.float32)
    b = b.astype(jnp.float32)
    return float(jnp.linalg.norm(a - b) / (jnp.linalg.norm(b) + 1e-12))


if __name__ == "__main__":
    key = jax.random.PRNGKey(0)
    B, Cf, N1 = 2, 16, 128
    n2_sizes = [128, 64, 32, 16]          # 4-level pyramid of xyz2
    out_channels, knn_k = 64, 16

    keys = jax.random.split(key, 8)
    xyz1 = jax.random.normal(keys[0], (B, 3, N1), jnp.float32)
    xyzs2 = [jax.random.normal(keys[1 + i], (B, 3, n), jnp.float32)
             for i, n in enumerate(n2_sizes)]
    feat1 = jax.random.normal(keys[5], (B, Cf, N1), jnp.float32)
    feat2 = jax.random.normal(keys[6], (B, Cf, n2_sizes[0]), jnp.float32)
    params = init_params(keys[7], out_channels, n_levels=len(n2_sizes))

    pyramid = build_cost_volume_pyramid(feat1, feat2, xyzs2, k=3)
    costs = correlation3d_forward(xyz1, xyzs2, pyramid, params, knn_k, out_channels)
    costs = jax.block_until_ready(costs)
    assert costs.shape == (B, out_channels, N1), costs.shape
    assert bool(jnp.all(jnp.isfinite(costs)))

    # --- sanity checks vs pure-JAX references (aggregate norms, bf16-tolerant) ---
    cv_ref = jnp.einsum('bcm,bcn->bmn', feat1, feat2) / Cf
    assert _rel_err(pyramid[0], cv_ref) < 2e-2

    d_ref = jnp.sum((xyz1[:, :, :, None] - xyzs2[0][:, :, None, :]) ** 2, axis=1)
    idx = k_nearest_neighbor(xyzs2[0], xyz1, knn_k)
    d_sel = jnp.sort(jnp.take_along_axis(d_ref, idx, axis=2), axis=-1)
    d_true = jnp.sort(-jax.lax.top_k(-d_ref, knn_k)[0], axis=-1)
    assert _rel_err(d_sel, d_true) < 1e-3

    ref = _reference_forward(xyz1, xyzs2, pyramid, params, knn_k)
    assert _rel_err(costs, ref) < 5e-2

    print("KERNEL_OK")
</pallas_src>

<mosaic_0001>
module attributes {stable_mosaic.version = 11 : i64} {
  func.func @_cost_volume_kernel(%arg0: i32, %arg1: i32, %arg2: i32, %arg3: memref<1x128x16xbf16, #tpu.memory_space<vmem>>, %arg4: memref<1x16x128xbf16, #tpu.memory_space<vmem>>, %arg5: memref<1x128x128xbf16, #tpu.memory_space<vmem>>) attributes {dimension_semantics = [#tpu.dimension_semantics<parallel>, #tpu.dimension_semantics<parallel>, #tpu.dimension_semantics<parallel>], iteration_bounds = array<i64: 2, 1, 1>, scalar_prefetch = 0 : i64, scratch_operands = 0 : i64, tpu.core_type = #tpu.core_type<tc>, window_params = [{transform_indices = @transform_0, window_bounds = array<i64: 1, 128, 16>}, {transform_indices = @transform_1, window_bounds = array<i64: 1, 16, 128>}, {transform_indices = @transform_2, window_bounds = array<i64: 1, 128, 128>}]} {
    %c0 = arith.constant 0 : index
    %c0_0 = arith.constant 0 : index
    %c0_1 = arith.constant 0 : index
    %0 = vector.load %arg3[%c0, %c0_0, %c0_1] : memref<1x128x16xbf16, #tpu.memory_space<vmem>>, vector<1x128x16xbf16>
    %1 = vector.shape_cast %0 : vector<1x128x16xbf16> to vector<128x16xbf16>
    %c0_2 = arith.constant 0 : index
    %c0_3 = arith.constant 0 : index
    %c0_4 = arith.constant 0 : index
    %2 = vector.load %arg4[%c0_2, %c0_3, %c0_4] : memref<1x16x128xbf16, #tpu.memory_space<vmem>>, vector<1x16x128xbf16>
    %3 = vector.shape_cast %2 : vector<1x16x128xbf16> to vector<16x128xbf16>
    %cst = arith.constant dense<0.000000e+00> : vector<128x128xf32>
    %4 = tpu.matmul %1, %3, %cst {dimension_numbers = #tpu.dot_dimension_numbers<[1], [0], [0], [1], [0, 0, 1, 1], [], []>} : vector<128x16xbf16>, vector<16x128xbf16>, vector<128x128xf32> -> vector<128x128xf32>
    %cst_5 = arith.constant 6.250000e-02 : f32
    %5 = vector.broadcast %cst_5 : f32 to vector<128x128xf32>
    %6 = arith.mulf %4, %5 : vector<128x128xf32>
    %7 = arith.truncf %6 : vector<128x128xf32> to vector<128x128xbf16>
    %c0_6 = arith.constant 0 : index
    %c0_7 = arith.constant 0 : index
    %c0_8 = arith.constant 0 : index
    %8 = vector.load %arg5[%c0_6, %c0_7, %c0_8] : memref<1x128x128xbf16, #tpu.memory_space<vmem>>, vector<1x128x128xbf16>
    %9 = vector.shape_cast %8 : vector<1x128x128xbf16> to vector<128x128xbf16>
    %10 = vector.shape_cast %7 : vector<128x128xbf16> to vector<1x128x128xbf16>
    tpu.vector_store %arg5[%c0_6, %c0_7, %c0_8], %10 {strides = array<i32>} : memref<1x128x128xbf16, #tpu.memory_space<vmem>>, vector<1x128x128xbf16>,
    return
  }
  func.func @transform_0(%arg0: i32, %arg1: i32, %arg2: i32) -> (i32, i32, i32) {
    %c0_i32 = arith.constant 0 : i32
    %c0_i32_0 = arith.constant 0 : i32
    return %arg0, %arg1, %c0_i32 : i32, i32, i32
  }
  func.func @transform_1(%arg0: i32, %arg1: i32, %arg2: i32) -> (i32, i32, i32) {
    %c0_i32 = arith.constant 0 : i32
    %c0_i32_0 = arith.constant 0 : i32
    return %arg0, %c0_i32, %arg2 : i32, i32, i32
  }
  func.func @transform_2(%arg0: i32, %arg1: i32, %arg2: i32) -> (i32, i32, i32) {
    %c0_i32 = arith.constant 0 : i32
    return %arg0, %arg1, %arg2 : i32, i32, i32
  }
}

</mosaic_0001>

<llo_original>
// kernel: tpu_custom_call.1
$region0: #{tpu_custom_call.1}
  #allocation0 [shape = 'u32[]', space=smem, size = 0x4, offset = 0x4, fixed_abs, tag = 'smem constant byte address 0x4 - core index']
  #allocation1 [shape = 'u32[144,128]{1,0:T(1,128)}', space=vmem, size = 0x12000, scoped, tag = 'internal scratch']
  %s0 = inlined_call_operand.vmem [shape: bf16[2,128,16], index: 0, kind: input, shape index: {}]
  %s1 = inlined_call_operand.vmem [shape: bf16[2,16,128], index: 1, kind: input, shape index: {}]
  %s2 = inlined_call_operand.hbm [shape: bf16[2,128,128], index: 2, kind: output, shape index: {}]
  %s3 = sld [smem:[#allocation0]]
  $region41: #{tpu_custom_call.1} parent=0
    _
  %s5 = ssub.s32 1, %s3
  %s6 = scalar_select 0, %s5, %s3
  $region1: #{tpu_custom_call.1} parent=0
    #allocation2 [shape = 'u8[65536]{0}', space=vmem, size = 0x10000, scoped, tag = 'output window, operand 0']
    #allocation3 [shape = 's32[2]{0}', space=sflag, size = 0x8, scoped, tag = 'scoped memory for tpu_custom_call.1']
    %7 = vsyncpa [#allocation3], 0
    %s8 = scalar_lea.sflag [#allocation3], 1
    %9 = vsyncpa %s8, 0
    loop: start=0, step=1, limit=4
    $region2: #{tpu_custom_call.1} parent=1 // loop_pre_header
      _
    $region3: #{tpu_custom_call.1} parent=1 // loop_header
      %s11 = sphi 0, %s15
      %p12 = scmp.ge.s32.totalorder %s11, 4
      %s18 = sphi 0, %s37
      %s19 = sphi 0, %s33
      %s20 = sphi 0, %s29
      %s21 = sphi 0, %s18
      %s22 = sphi 0, %s19
      %s23 = sphi 0, %s20
      %s24 = sphi 0, %s21
      %s25 = sphi 0, %s22
      %s26 = sphi 0, %s23
      %s42 = sphi 0, %s44
      %s45 = sphi 0, %s42
      %s46 = sphi 0, %s45
      %s62 = sphi 0, %s46
      %s70 = sphi 0, %s72
      %s73 = sphi 0, %s70
      %s74 = sphi 0, %s73
      %s90 = sphi 0, %s74
      %s100 = sphi 0, %s102
      %s103 = sphi 0, %s100
      %s104 = sphi 0, %s103
      %s120 = sphi 0, %s104
    $region4: #{tpu_custom_call.1} parent=1 // loop_header_branch
      %14 = sbr.rel (%p12) target = $region8
    $region5: #{tpu_custom_call.1} parent=1 // loop_body
      %s16 = ssub.s32 %s11, 1
      %s17 = ssub.s32 %s11, 2
      %s27 = sadd.s32 1, %s20
      %p28 = scmp.ge.s32.totalorder %s27, 1
      %s29 = scalar_select %p28, 0, %s27
      %s30 = sadd.s32 1, %s19
      %s31 = scalar_select %p28, %s30, %s19
      %p32 = scmp.ge.s32.totalorder %s31, 1
      %s33 = scalar_select %p32, 0, %s31
      %s34 = sadd.s32 1, %s18
      %s35 = scalar_select %p32, %s34, %s18
      %p36 = scmp.ge.s32.totalorder %s35, 2
      %s37 = scalar_select %p36, 0, %s35
      %s38 = ssub.s32 %s18, %s37
      %s39 = ssub.s32 %s19, %s33
      %s40 = sor.u32 %s38, %s39
      %p41 = scmp.eq.s32.totalorder %s40, 0
      %s43 = sadd.s32 %s42, 1
      %s44 = scalar_select %p41, %s42, %s43
      %p47 = pneg %p41
      %p48 = scmp.eq.s32.totalorder %s11, 1
      %p49 = por %p47, %p48
      %p50 = scmp.ne.s32.totalorder %s42, %s45
      %p51 = scmp.eq.s32.totalorder %s11, 0
      %p52 = por %p50, %p51
      %p53 = scmp.ne.s32.totalorder %s42, %s45
      %p54 = scmp.eq.s32.totalorder %s16, 1
      %p55 = por %p53, %p54
      %p56 = scmp.ne.s32.totalorder %s45, %s46
      %p57 = scmp.eq.s32.totalorder %s16, 0
      %p58 = por %p56, %p57
      %p59 = scmp.ne.s32.totalorder %s45, %s46
      %p60 = scmp.eq.s32.totalorder %s17, 1
      %p61 = por %p59, %p60
      %p63 = scmp.ne.s32.totalorder %s46, %s62
      %p64 = scmp.eq.s32.totalorder %s17, 0
      %p65 = por %p63, %p64
      %s66 = ssub.s32 %s18, %s37
      %s67 = ssub.s32 %s20, %s29
      %s68 = sor.u32 %s66, %s67
      %p69 = scmp.eq.s32.totalorder %s68, 0
      %s71 = sadd.s32 %s70, 1
      %s72 = scalar_select %p69, %s70, %s71
      %p75 = pneg %p69
      %p76 = scmp.eq.s32.totalorder %s11, 1
      %p77 = por %p75, %p76
      %p78 = scmp.ne.s32.totalorder %s70, %s73
      %p79 = scmp.eq.s32.totalorder %s11, 0
      %p80 = por %p78, %p79
      %p81 = scmp.ne.s32.totalorder %s70, %s73
      %p82 = scmp.eq.s32.totalorder %s16, 1
      %p83 = por %p81, %p82
      %p84 = scmp.ne.s32.totalorder %s73, %s74
      %p85 = scmp.eq.s32.totalorder %s16, 0
      %p86 = por %p84, %p85
      %p87 = scmp.ne.s32.totalorder %s73, %s74
      %p88 = scmp.eq.s32.totalorder %s17, 1
      %p89 = por %p87, %p88
      %p91 = scmp.ne.s32.totalorder %s74, %s90
      %p92 = scmp.eq.s32.totalorder %s17, 0
      %p93 = por %p91, %p92
      %s94 = ssub.s32 %s18, %s37
      %s95 = ssub.s32 %s19, %s33
      %s96 = sor.u32 %s94, %s95
      %s97 = ssub.s32 %s20, %s29
      %s98 = sor.u32 %s96, %s97
      %p99 = scmp.eq.s32.totalorder %s98, 0
      %s101 = sadd.s32 %s100, 1
      %s102 = scalar_select %p99, %s100, %s101
      %p105 = pneg %p99
      %p106 = scmp.eq.s32.totalorder %s11, 1
      %p107 = por %p105, %p106
      %p108 = scmp.ne.s32.totalorder %s100, %s103
      %p109 = scmp.eq.s32.totalorder %s11, 0
      %p110 = por %p108, %p109
      %p111 = scmp.ne.s32.totalorder %s100, %s103
      %p112 = scmp.eq.s32.totalorder %s16, 1
      %p113 = por %p111, %p112
      %p114 = scmp.ne.s32.totalorder %s103, %s104
      %p115 = scmp.eq.s32.totalorder %s16, 0
      %p116 = por %p114, %p115
      %p117 = scmp.ne.s32.totalorder %s103, %s104
      %p118 = scmp.eq.s32.totalorder %s17, 1
      %p119 = por %p117, %p118
      %p121 = scmp.ne.s32.totalorder %s104, %s120
      %p122 = scmp.eq.s32.totalorder %s17, 0
      %p123 = por %p121, %p122
      %p124 = scmp.le.s32.totalorder 1, %s11
      %p125 = scmp.lt.s32.totalorder %s11, 3
      %p126 = pnand %p124, %p125
      %p127 = pneg %p126
      // Predicated region
      $region9: #{tpu_custom_call.1} parent=5 // pred_check
        _
      $region10: #{tpu_custom_call.1} parent=5 // pred_check_branch
        %129 = sbr.rel (%p126) target = $region12
      $region11: #{tpu_custom_call.1} parent=5 // pred_region
        %s130 = ssub.s32 %s11, 1
      $region12: #{tpu_custom_call.1} parent=5 // pred_fallthru
        _
      %p131 = scmp.lt.s32.totalorder %s11, 2
      // Predicated region
      $region13: #{tpu_custom_call.1} parent=5 // pred_check
        %p132 = pneg %p131
      $region14: #{tpu_custom_call.1} parent=5 // pred_check_branch
        %134 = sbr.rel (%p132) target = $region16
      $region15: #{tpu_custom_call.1} parent=5 // pred_region
        // Predicated region
        $region17: #{tpu_custom_call.1} parent=15 // pred_check
          %p135 = pneg %p52
        $region18: #{tpu_custom_call.1} parent=15 // pred_check_branch
          %137 = sbr.rel (%p135) target = $region20
        $region19: #{tpu_custom_call.1} parent=15 // pred_region
          %s138 = smul.u32 16, %s19
          %p139 = scmp.lt.s32.totalorder %s18, 1
          %s140 = scalar_select %p139, %s18, 1
          %p141 = scmp.lt.s32.totalorder %s138, 15
          %s142 = scalar_select %p141, %s138, 15
          %s143 = smul.addr %s140, 16
          %s144 = sadd.s32 %s142, %s143
          %s145 = smul.addr %s144, 4
          %s146 = scalar_lea.vmem %s0, %s145
          %s147 = smul.u32 16, %s19
        $region20: #{tpu_custom_call.1} parent=15 // pred_fallthru
          _
        // Predicated region
        $region21: #{tpu_custom_call.1} parent=15 // pred_check
          %p148 = pneg %p80
        $region22: #{tpu_custom_call.1} parent=15 // pred_check_branch
          %150 = sbr.rel (%p148) target = $region24
        $region23: #{tpu_custom_call.1} parent=15 // pred_region
          %p151 = scmp.lt.s32.totalorder %s18, 1
          %s152 = scalar_select %p151, %s18, 1
          %p153 = scmp.lt.s32.totalorder %s20, 0
          %s154 = scalar_select %p153, %s20, 0
          %s155 = smul.addr %s152, 2
          %s156 = sadd.s32 %s154, %s155
          %s157 = smul.addr %s156, 4
          %s158 = scalar_lea.vmem %s1, %s157
        $region24: #{tpu_custom_call.1} parent=15 // pred_fallthru
          _
      $region16: #{tpu_custom_call.1} parent=5 // pred_fallthru
        _
      %p159 = scmp.le.s32.totalorder 1, %s11
      %p160 = scmp.lt.s32.totalorder %s11, 3
      %p161 = pnand %p159, %p160
      %p162 = pneg %p161
      // Predicated region
      $region25: #{tpu_custom_call.1} parent=5 // pred_check
        _
      $region26: #{tpu_custom_call.1} parent=5 // pred_check_branch
        %164 = sbr.rel (%p161) target = $region28
      $region27: #{tpu_custom_call.1} parent=5 // pred_region
        %s165 = ssub.s32 %s11, 1
        %s166 = smul.u32 16, %s22
        %p167 = scmp.lt.s32.totalorder %s21, 1
        %s168 = scalar_select %p167, %s21, 1
        %p169 = scmp.lt.s32.totalorder %s166, 15
        %s170 = scalar_select %p169, %s166, 15
        %s171 = smul.addr %s168, 16
        %s172 = sadd.s32 %s170, %s171
        %s173 = smul.addr %s172, 4
        %s174 = scalar_lea.vmem %s0, %s173
        %p175 = pneg %p58
        %p176 = pneg %p55
        %p177 = scmp.lt.s32.totalorder %s21, 1
        %s178 = scalar_select %p177, %s21, 1
        %p179 = scmp.lt.s32.totalorder %s23, 0
        %s180 = scalar_select %p179, %s23, 0
        %s181 = smul.addr %s178, 2
        %s182 = sadd.s32 %s180, %s181
        %s183 = smul.addr %s182, 4
        %s184 = scalar_lea.vmem %s1, %s183
        %p185 = pneg %p86
        %p186 = pneg %p83
        %p187 = pneg %p116
        %p188 = pneg %p113
        %s189 = sand.u32 %s103, 1
        %s190 = scalar_lea.sflag [#allocation3], %s189
        %s191 = sand.u32 %s103, 1
        %s192 = smul.addr %s191, 64
        %s193 = scalar_lea.vmem [#allocation2], %s192
        %s194 = smul.u32 16, %s22
        %p195 = scmp.lt.s32.totalorder %s21, 1
        %s196 = scalar_select %p195, %s21, 1
        %p197 = scmp.lt.s32.totalorder %s194, 15
        %s198 = scalar_select %p197, %s194, 15
        %s199 = smul.addr %s196, 16
        %s200 = sadd.s32 %s198, %s199
        %s201 = smul.addr %s200, 4
        %s202 = scalar_lea.vmem %s0, %s201
        %s203 = smul.u32 16, %s22
        %p204 = scmp.lt.s32.totalorder %s21, 1
        %s205 = scalar_select %p204, %s21, 1
        %p206 = scmp.lt.s32.totalorder %s23, 0
        %s207 = scalar_select %p206, %s23, 0
        %s208 = smul.addr %s205, 2
        %s209 = sadd.s32 %s207, %s208
        %s210 = smul.addr %s209, 4
        %s211 = scalar_lea.vmem %s1, %s210
        %s212 = smul.u32 16, %s22
        %v214 = vld [vmem:[%s202] sm:$0xf]
        %v215 = vld [vmem:[%s202 + $0x4] sm:$0xf]
        %v216 = vld [vmem:[%s202 + $0x8] sm:$0xf]
        %v217 = vld [vmem:[%s202 + $0xc] sm:$0xf]
        %v218 = vld [vmem:[%s202 + $0x10] sm:$0xf]
        %v219 = vld [vmem:[%s202 + $0x14] sm:$0xf]
        %v220 = vld [vmem:[%s202 + $0x18] sm:$0xf]
        %v221 = vld [vmem:[%s202 + $0x1c] sm:$0xf]
        %v222 = vld [vmem:[%s202 + $0x20] sm:$0xf]
        %v223 = vld [vmem:[%s202 + $0x24] sm:$0xf]
        %v224 = vld [vmem:[%s202 + $0x28] sm:$0xf]
        %v225 = vld [vmem:[%s202 + $0x2c] sm:$0xf]
        %v226 = vld [vmem:[%s202 + $0x30] sm:$0xf]
        %v227 = vld [vmem:[%s202 + $0x34] sm:$0xf]
        %v228 = vld [vmem:[%s202 + $0x38] sm:$0xf]
        %v229 = vld [vmem:[%s202 + $0x3c] sm:$0xf]
        %v230 = vld [vmem:[%s211] sm:$0xf]
        %v231 = vld [vmem:[%s211 + $0x4] sm:$0xf]
        %v248 = vunpack.c.l.b16 %v214
        %v249 = vunpack.c.l.b16 %v215
        %v250 = vunpack.c.l.b16 %v216
        %v251 = vunpack.c.l.b16 %v217
        %v252 = vunpack.c.l.b16 %v218
        %v253 = vunpack.c.l.b16 %v219
        %v254 = vunpack.c.l.b16 %v220
        %v255 = vunpack.c.l.b16 %v221
        %v256 = vunpack.c.l.b16 %v222
        %v257 = vunpack.c.l.b16 %v223
        %v258 = vunpack.c.l.b16 %v224
        %v259 = vunpack.c.l.b16 %v225
        %v260 = vunpack.c.l.b16 %v226
        %v261 = vunpack.c.l.b16 %v227
        %v262 = vunpack.c.l.b16 %v228
        %v263 = vunpack.c.l.b16 %v229
        %v264 = vpack.c.b16 %v249, %v248
        %v265 = vpack.c.b16 %v251, %v250
        %v266 = vpack.c.b16 %v253, %v252
        %v267 = vpack.c.b16 %v255, %v254
        %v268 = vpack.c.b16 %v257, %v256
        %v269 = vpack.c.b16 %v259, %v258
        %v270 = vpack.c.b16 %v261, %v260
        %v271 = vpack.c.b16 %v263, %v262
        %v274 = vunpack.c.l.b16 %v230
        %v275 = vunpack.c.l.b16 %v231
        %v276 = vpack.c.b16 %v275, %v274
        %vm278 = vcmask 130048
        %v280 = vsel %vm278, %v264, 0
        %v283 = vsel %vm278, %v265, 0
        %v286 = vsel %vm278, %v266, 0
        %v289 = vsel %vm278, %v267, 0
        %v292 = vsel %vm278, %v268, 0
        %v295 = vsel %vm278, %v269, 0
        %v298 = vsel %vm278, %v270, 0
        %v301 = vsel %vm278, %v271, 0
        %303 = vmatprep.subr.bf16.mxu0 0
        %304 = vmatpush1.bf16.msra.mxu0 0
        %305 = vmatprep.subr.bf16.mxu0 0
        %306 = vmatpush1.bf16.msra.mxu0 0
        %307 = vmatprep.subr.bf16.mxu0 0
        %308 = vmatpush1.bf16.msra.mxu0 0
        %309 = vmatprep.subr.bf16.mxu0 0
        %310 = vmatpush1.bf16.msra.mxu0 0
        %311 = vmatprep.subr.bf16.mxu0 0
        %312 = vmatpush1.bf16.msra.mxu0 0
        %313 = vmatprep.subr.bf16.mxu0 0
        %314 = vmatpush1.bf16.msra.mxu0 0
        %315 = vmatprep.subr.bf16.mxu0 0
        %316 = vmatpush1.bf16.msra.mxu0 0
        %317 = vmatprep.subr.bf16.mxu0 0
        %318 = vmatpush1.bf16.msra.mxu0 %v276
        %319 = vmatprep.subr.bf16.mxu0 0
        %320 = vmatpush2.bf16.msra.mxu0 0
        %321 = vmatprep.subr.bf16.mxu0 0
        %322 = vmatpush2.bf16.msra.mxu0 0
        %323 = vmatprep.subr.bf16.mxu0 0
        %324 = vmatpush2.bf16.msra.mxu0 0
        %325 = vmatprep.subr.bf16.mxu0 0
        %326 = vmatpush2.bf16.msra.mxu0 0
        %327 = vmatprep.subr.bf16.mxu0 0
        %328 = vmatpush2.bf16.msra.mxu0 0
        %329 = vmatprep.subr.bf16.mxu0 0
        %330 = vmatpush2.bf16.msra.mxu0 0
        %331 = vmatprep.subr.bf16.mxu0 0
        %332 = vmatpush2.bf16.msra.mxu0 0
        %333 = vmatprep.subr.bf16.mxu0 0
        %334 = vmatpush2.bf16.msra.mxu0 0
        %335 = vmatprep.mubr.bf16.mxu0 0
        %336 = vmatmul.mubr.bf16.gmra.mxu0 %v280
        %v337 = vpop.f32.mrf.mxu0
        %v338 = vadd.f32 0.0, %v337
        %v339 = vpop.f32.mrf.mxu0
        %v340 = vpop.f32.mrf.mxu0
        %v341 = vadd.f32 0.0, %v340
        %v342 = vpop.f32.mrf.mxu0
        %343 = vmatprep.mubr.bf16.mxu0 0
        %344 = vmatmul.mubr.bf16.gmra.mxu0 %v283
        %v345 = vpop.f32.mrf.mxu0
        %v346 = vadd.f32 0.0, %v345
        %v347 = vpop.f32.mrf.mxu0
        %v348 = vpop.f32.mrf.mxu0
        %v349 = vadd.f32 0.0, %v348
        %v350 = vpop.f32.mrf.mxu0
        %351 = vmatprep.mubr.bf16.mxu0 0
        %352 = vmatmul.mubr.bf16.gmra.mxu0 %v286
        %v353 = vpop.f32.mrf.mxu0
        %v354 = vadd.f32 0.0, %v353
        %v355 = vpop.f32.mrf.mxu0
        %v356 = vpop.f32.mrf.mxu0
        %v357 = vadd.f32 0.0, %v356
        %v358 = vpop.f32.mrf.mxu0
        %359 = vmatprep.mubr.bf16.mxu0 0
        %360 = vmatmul.mubr.bf16.gmra.mxu0 %v289
        %v361 = vpop.f32.mrf.mxu0
        %v362 = vadd.f32 0.0, %v361
        %v363 = vpop.f32.mrf.mxu0
        %v364 = vpop.f32.mrf.mxu0
        %v365 = vadd.f32 0.0, %v364
        %v366 = vpop.f32.mrf.mxu0
        %367 = vmatprep.mubr.bf16.mxu0 0
        %368 = vmatmul.mubr.bf16.gmra.mxu0 %v292
        %v369 = vpop.f32.mrf.mxu0
        %v370 = vadd.f32 0.0, %v369
        %v371 = vpop.f32.mrf.mxu0
        %v372 = vpop.f32.mrf.mxu0
        %v373 = vadd.f32 0.0, %v372
        %v374 = vpop.f32.mrf.mxu0
        %375 = vmatprep.mubr.bf16.mxu0 0
        %376 = vmatmul.mubr.bf16.gmra.mxu0 %v295
        %v377 = vpop.f32.mrf.mxu0
        %v378 = vadd.f32 0.0, %v377
        %v379 = vpop.f32.mrf.mxu0
        %v380 = vpop.f32.mrf.mxu0
        %v381 = vadd.f32 0.0, %v380
        %v382 = vpop.f32.mrf.mxu0
        %383 = vmatprep.mubr.bf16.mxu0 0
        %384 = vmatmul.mubr.bf16.gmra.mxu0 %v298
        %v385 = vpop.f32.mrf.mxu0
        %v386 = vadd.f32 0.0, %v385
        %v387 = vpop.f32.mrf.mxu0
        %v388 = vpop.f32.mrf.mxu0
        %v389 = vadd.f32 0.0, %v388
        %v390 = vpop.f32.mrf.mxu0
        %391 = vmatprep.mubr.bf16.mxu0 0
        %392 = vmatmul.mubr.bf16.gmra.mxu0 %v301
        %v393 = vpop.f32.mrf.mxu0
        %v394 = vadd.f32 0.0, %v393
        %v395 = vpop.f32.mrf.mxu0
        %v396 = vpop.f32.mrf.mxu0
        %v397 = vadd.f32 0.0, %v396
        %v398 = vpop.f32.mrf.mxu0
        %399 = vdwg.mxu0
        %v400 = vmul.f32 %v338, 0.0625
        %v401 = vmul.f32 %v341, 0.0625
        %v402 = vmul.f32 %v346, 0.0625
        %v403 = vmul.f32 %v349, 0.0625
        %v404 = vmul.f32 %v354, 0.0625
        %v405 = vmul.f32 %v357, 0.0625
        %v406 = vmul.f32 %v362, 0.0625
        %v407 = vmul.f32 %v365, 0.0625
        %v408 = vmul.f32 %v370, 0.0625
        %v409 = vmul.f32 %v373, 0.0625
        %v410 = vmul.f32 %v378, 0.0625
        %v411 = vmul.f32 %v381, 0.0625
        %v412 = vmul.f32 %v386, 0.0625
        %v413 = vmul.f32 %v389, 0.0625
        %v414 = vmul.f32 %v394, 0.0625
        %v415 = vmul.f32 %v397, 0.0625
        %v416 = vpack.c.bf16 %v401, %v400
        %v417 = vpack.c.bf16 %v403, %v402
        %v418 = vpack.c.bf16 %v405, %v404
        %v419 = vpack.c.bf16 %v407, %v406
        %v420 = vpack.c.bf16 %v409, %v408
        %v421 = vpack.c.bf16 %v411, %v410
        %v422 = vpack.c.bf16 %v413, %v412
        %v423 = vpack.c.bf16 %v415, %v414
        %v432 = vunpack.c.l.b16 %v416
        %v433 = vunpack.c.h.b16 %v416
        %v434 = vunpack.c.l.b16 %v417
        %v435 = vunpack.c.h.b16 %v417
        %v436 = vunpack.c.l.b16 %v418
        %v437 = vunpack.c.h.b16 %v418
        %v438 = vunpack.c.l.b16 %v419
        %v439 = vunpack.c.h.b16 %v419
        %v440 = vunpack.c.l.b16 %v420
        %v441 = vunpack.c.h.b16 %v420
        %v442 = vunpack.c.l.b16 %v421
        %v443 = vunpack.c.h.b16 %v421
        %v444 = vunpack.c.l.b16 %v422
        %v445 = vunpack.c.h.b16 %v422
        %v446 = vunpack.c.l.b16 %v423
        %v447 = vunpack.c.h.b16 %v423
        %v448 = vpack.c.b16 %v432, %v432
        %v449 = vpack.c.b16 %v433, %v433
        %v450 = vpack.c.b16 %v434, %v434
        %v451 = vpack.c.b16 %v435, %v435
        %v452 = vpack.c.b16 %v436, %v436
        %v453 = vpack.c.b16 %v437, %v437
        %v454 = vpack.c.b16 %v438, %v438
        %v455 = vpack.c.b16 %v439, %v439
        %v456 = vpack.c.b16 %v440, %v440
        %v457 = vpack.c.b16 %v441, %v441
        %v458 = vpack.c.b16 %v442, %v442
        %v459 = vpack.c.b16 %v443, %v443
        %v460 = vpack.c.b16 %v444, %v444
        %v461 = vpack.c.b16 %v445, %v445
        %v462 = vpack.c.b16 %v446, %v446
        %v463 = vpack.c.b16 %v447, %v447
        %480 = vst [vmem:[%s193] sm:$0xf] %v448
        %481 = vst [vmem:[%s193 + $0x4] sm:$0xf] %v449
        %482 = vst [vmem:[%s193 + $0x8] sm:$0xf] %v450
        %483 = vst [vmem:[%s193 + $0xc] sm:$0xf] %v451
        %484 = vst [vmem:[%s193 + $0x10] sm:$0xf] %v452
        %485 = vst [vmem:[%s193 + $0x14] sm:$0xf] %v453
        %486 = vst [vmem:[%s193 + $0x18] sm:$0xf] %v454
        %487 = vst [vmem:[%s193 + $0x1c] sm:$0xf] %v455
        %488 = vst [vmem:[%s193 + $0x20] sm:$0xf] %v456
        %489 = vst [vmem:[%s193 + $0x24] sm:$0xf] %v457
        %490 = vst [vmem:[%s193 + $0x28] sm:$0xf] %v458
        %491 = vst [vmem:[%s193 + $0x2c] sm:$0xf] %v459
        %492 = vst [vmem:[%s193 + $0x30] sm:$0xf] %v460
        %493 = vst [vmem:[%s193 + $0x34] sm:$0xf] %v461
        %494 = vst [vmem:[%s193 + $0x38] sm:$0xf] %v462
        %495 = vst [vmem:[%s193 + $0x3c] sm:$0xf] %v463
        %s496 = sand.u32 %s103, 1
        %s497 = scalar_lea.sflag [#allocation3], %s496
        %s498 = sand.u32 %s103, 1
        %s499 = smul.addr %s498, 64
        %s500 = scalar_lea.vmem [#allocation2], %s499
        // Predicated region
        $region29: #{tpu_custom_call.1} parent=27 // pred_check
          %p501 = pneg %p113
        $region30: #{tpu_custom_call.1} parent=27 // pred_check_branch
          %503 = sbr.rel (%p501) target = $region32
        $region31: #{tpu_custom_call.1} parent=27 // pred_region
          %s504 = smul.u32 16, %s22
          %s506 = ssub.s32 1024, 1024
          %507 = vsyncadd %s497, %s506
          %s508 = sadd.s32 %s23, %s504
          %s509 = smul.addr %s21, 16
          %s510 = sadd.s32 %s508, %s509
          %s511 = smul.addr %s510, 64
          %s512 = scalar_lea.hbm %s2, %s511
          %s513 = sshll.u32 %s500, 4
          %s514 = int_to_ptr.vmem [resolvable:$true] %s513
          %519 = dma.vmem_to_hbm [thread:$0]  %s514, 1024, %s512, %s497, 64, 64, 4
        $region32: #{tpu_custom_call.1} parent=27 // pred_fallthru
          _
      $region28: #{tpu_custom_call.1} parent=5 // pred_fallthru
        _
      %p520 = scmp.le.s32.totalorder 2, %s11
      // Predicated region
      $region33: #{tpu_custom_call.1} parent=5 // pred_check
        %p521 = pneg %p520
      $region34: #{tpu_custom_call.1} parent=5 // pred_check_branch
        %523 = sbr.rel (%p521) target = $region36
      $region35: #{tpu_custom_call.1} parent=5 // pred_region
        %s524 = ssub.s32 %s11, 2
        // Predicated region
        $region37: #{tpu_custom_call.1} parent=35 // pred_check
          %p525 = pneg %p119
        $region38: #{tpu_custom_call.1} parent=35 // pred_check_branch
          %527 = sbr.rel (%p525) target = $region40
        $region39: #{tpu_custom_call.1} parent=35 // pred_region
          %s528 = sand.u32 %s104, 1
          %s529 = scalar_lea.sflag [#allocation3], %s528
          %s530 = sand.u32 %s104, 1
          %s531 = smul.addr %s530, 64
          %s532 = scalar_lea.vmem [#allocation2], %s531
          %533 = dma.done %s529, 1024
        $region40: #{tpu_custom_call.1} parent=35 // pred_fallthru
          _
      $region36: #{tpu_custom_call.1} parent=5 // pred_fallthru
        _
    $region6: #{tpu_custom_call.1} parent=1 // loop_footer
      %s15 = sadd.s32 1, %s11
    $region7: #{tpu_custom_call.1} parent=1 // loop_footer_branch
      %10 = sbr.rel target = $region3
    $region8: #{tpu_custom_call.1} parent=1 // loop_exit
      _
    %534 = vsyncpa [#allocation3], 1
    %s535 = scalar_lea.sflag [#allocation3], 1
    %536 = vsyncpa %s535, 1

</llo_original>
